<compile_context>
chip_gen: v5e
topology: v5e:2x2
jax: 0.10.0
libtpu: 0.0.40
codegen_flags: <defaults>
</compile_context>

<pallas_src>
import functools

import jax
import jax.numpy as jnp
from jax import lax
from jax.experimental import pallas as pl
from jax.experimental.pallas import tpu as pltpu


def _round_up(a: int, b: int) -> int:
    return ((a + b - 1) // b) * b


def _cdiv(a: int, b: int) -> int:
    return -(-a // b)


def _num_tensorcores() -> int:
    """2 on v7x-class parts (2 TC/chip), 1 on v5e/v6e.  Best-effort."""
    try:
        kind = jax.devices()[0].device_kind.lower()
        if "v7" in kind or "7x" in kind:
            return 2
    except Exception:
        pass
    return 1


def _choose_tiling(n: int, num_cores: int, tm_cap: int = 4096):
    """Return (tm, tiles): row-tile size (multiple of 8) and grid length."""
    n8 = _round_up(max(n, 8), 8)
    if num_cores <= 1 and n8 <= tm_cap:
        return n8, 1                      # single grid step, zero extra overhead
    tiles = max(num_cores, _cdiv(n8, tm_cap))
    tm = _round_up(_cdiv(n8, tiles), 8)
    tiles = _cdiv(n8, tm)
    return tm, tiles


def _kernel_dout1(x_ref, w1_ref, b1_ref, w2r_ref, b2_ref, o_ref, *, matmul_dtype):
    # ---- Layer 1 on the MXU, f32 accumulation -------------------------------
    x = x_ref[...]
    if x.dtype != matmul_dtype:
        x = x.astype(matmul_dtype)        # no-op in the default f32 config
    h = jnp.dot(x, w1_ref[...], preferred_element_type=jnp.float32)
    h = jnp.maximum(h + b1_ref[...], 0.0)                 # bias + ReLU (clamp(min=0))

    # ---- Layer 2 (D_out == 1), lane-dense -----------------------------------
    # Contract H between the (1, H) w2 row and the (tm, H) hidden tile to get a
    # (1, tm) row: output lanes are the batch dim -> unmasked full-width stores.
    y = lax.dot_general(w2r_ref[...], h,
                        dimension_numbers=(((1,), (1,)), ((), ())),
                        preferred_element_type=jnp.float32)
    y = y + b2_ref[...]                                    # (1, tm) + (1, 1)
    o_ref[...] = y[None].astype(o_ref.dtype)               # (1, 1, tm)


def _kernel_general(x_ref, w1_ref, b1_ref, w2_ref, b2_ref, o_ref, *, matmul_dtype):
    x = x_ref[...]
    if x.dtype != matmul_dtype:
        x = x.astype(matmul_dtype)
    h = jnp.dot(x, w1_ref[...], preferred_element_type=jnp.float32)
    h = jnp.maximum(h + b1_ref[...], 0.0)
    y = jnp.dot(h.astype(w2_ref.dtype), w2_ref[...],
                preferred_element_type=jnp.float32) + b2_ref[...]
    o_ref[...] = y.astype(o_ref.dtype)


def two_layer_net(x, w1, b1, w2, b2, *, matmul_dtype=jnp.float32, tm_cap: int = 4096):
    """y = relu(x @ w1 + b1) @ w2 + b2 with w1:(D_in,H), w2:(H,D_out),
    b1:(1,H), b2:(1,D_out).  Weights are stored transposed vs. nn.Linear."""
    N, D_in = x.shape
    H, D_out = w2.shape
    assert w1.shape == (D_in, H)
    assert b1.shape == (1, H) and b2.shape == (1, D_out)

    num_cores = _num_tensorcores()
    tm, tiles = _choose_tiling(N, num_cores, tm_cap)
    n_pad = tm * tiles
    if n_pad != N:
        # Ragged tail only; the common aligned case stays pad-free.
        x = jnp.pad(x, ((0, n_pad - N), (0, 0)))

    # Hoist the weight cast out of the kernel (one-time DMA, no per-step VALU).
    w1_in = w1 if w1.dtype == matmul_dtype else w1.astype(matmul_dtype)

    cost = pl.CostEstimate(
        flops=2 * n_pad * (D_in * H + H * D_out),
        transcendentals=0,
        bytes_accessed=4 * (n_pad * D_in + w1.size + b1.size + w2.size + b2.size
                            + n_pad * D_out))
    cparams = pltpu.CompilerParams(dimension_semantics=("parallel",))

    if D_out == 1:
        w2_row = w2.T                                     # (1, H), lane-dense
        kernel = functools.partial(_kernel_dout1, matmul_dtype=matmul_dtype)
        out = pl.pallas_call(
            kernel,
            out_shape=jax.ShapeDtypeStruct((tiles, 1, tm), jnp.float32),
            grid=(tiles,),
            in_specs=[
                pl.BlockSpec((tm, D_in), lambda i: (i, 0)),   # streamed batch rows
                pl.BlockSpec((D_in, H), lambda i: (0, 0)),    # VMEM-resident w1
                pl.BlockSpec((1, H), lambda i: (0, 0)),       # VMEM-resident b1
                pl.BlockSpec((1, H), lambda i: (0, 0)),       # VMEM-resident w2 row
                pl.BlockSpec((1, 1), lambda i: (0, 0)),       # VMEM-resident b2
            ],
            out_specs=pl.BlockSpec((1, 1, tm), lambda i: (i, 0, 0)),  # lane-dense slab
            compiler_params=cparams,
            cost_estimate=cost,
        )(x, w1_in, b1, w2_row, b2)
        return out.reshape(n_pad, 1)[:N]

    # General D_out path (not exercised by this module, kept for completeness).
    kernel = functools.partial(_kernel_general, matmul_dtype=matmul_dtype)
    out = pl.pallas_call(
        kernel,
        out_shape=jax.ShapeDtypeStruct((n_pad, D_out), jnp.float32),
        grid=(tiles,),
        in_specs=[
            pl.BlockSpec((tm, D_in), lambda i: (i, 0)),
            pl.BlockSpec((D_in, H), lambda i: (0, 0)),
            pl.BlockSpec((1, H), lambda i: (0, 0)),
            pl.BlockSpec((H, D_out), lambda i: (0, 0)),
            pl.BlockSpec((1, D_out), lambda i: (0, 0)),
        ],
        out_specs=pl.BlockSpec((tm, D_out), lambda i: (i, 0)),
        compiler_params=cparams,
        cost_estimate=cost,
    )(x, w1_in, b1, w2, b2)
    return out[:N]


if __name__ == "__main__":
    # TODO(synk): torch.load('models/model_40.pt') has no in-script equivalent;
    # weights are built deterministically with nn.Linear-style uniform init.
    N, D_in, H, D_out = 256, 16, 32, 1

    key = jax.random.PRNGKey(0)
    kx, k1, k2, k3, k4 = jax.random.split(key, 5)

    x = jax.random.normal(kx, (N, D_in), dtype=jnp.float32)
    bound1 = 1.0 / (D_in ** 0.5)
    bound2 = 1.0 / (H ** 0.5)
    # Stored transposed vs. torch (w1: (D_in, H), w2: (H, D_out)); biases 2-D.
    w1 = jax.random.uniform(k1, (D_in, H), jnp.float32, -bound1, bound1)
    b1 = jax.random.uniform(k2, (1, H), jnp.float32, -bound1, bound1)
    w2 = jax.random.uniform(k3, (H, D_out), jnp.float32, -bound2, bound2)
    b2 = jax.random.uniform(k4, (1, D_out), jnp.float32, -bound2, bound2)

    y = two_layer_net(x, w1, b1, w2, b2)
    jax.block_until_ready(y)
    assert y.shape == (N, D_out)

    # Reference: pure f32 PyTorch-semantics forward (kernel is f32 end-to-end,
    # so only accumulation-order noise remains).
    y_ref = jnp.maximum(x @ w1 + b1, 0.0) @ w2 + b2
    assert jnp.allclose(y, y_ref, atol=1e-4, rtol=1e-4)

    print("KERNEL_OK")
</pallas_src>

<mosaic_0001>
module attributes {stable_mosaic.version = 11 : i64} {
  func.func @_kernel_dout1(%arg0: i32, %arg1: memref<256x16xf32, #tpu.memory_space<vmem>>, %arg2: memref<16x32xf32, #tpu.memory_space<vmem>>, %arg3: memref<1x32xf32, #tpu.memory_space<vmem>>, %arg4: memref<1x32xf32, #tpu.memory_space<vmem>>, %arg5: memref<1x1xf32, #tpu.memory_space<vmem>>, %arg6: memref<1x1x256xf32, #tpu.memory_space<vmem>>) attributes {dimension_semantics = [#tpu.dimension_semantics<parallel>], iteration_bounds = array<i64: 1>, scalar_prefetch = 0 : i64, scratch_operands = 0 : i64, tpu.core_type = #tpu.core_type<tc>, window_params = [{transform_indices = @transform_0, window_bounds = array<i64: 256, 16>}, {pipeline_mode = #tpu.pipeline_mode<synchronous>, transform_indices = @transform_1, window_bounds = array<i64: 16, 32>}, {pipeline_mode = #tpu.pipeline_mode<synchronous>, transform_indices = @transform_2, window_bounds = array<i64: 1, 32>}, {pipeline_mode = #tpu.pipeline_mode<synchronous>, transform_indices = @transform_3, window_bounds = array<i64: 1, 32>}, {pipeline_mode = #tpu.pipeline_mode<synchronous>, transform_indices = @transform_4, window_bounds = array<i64: 1, 1>}, {transform_indices = @transform_5, window_bounds = array<i64: 1, 1, 256>}]} {
    %c0 = arith.constant 0 : index
    %c0_0 = arith.constant 0 : index
    %0 = vector.load %arg1[%c0, %c0_0] : memref<256x16xf32, #tpu.memory_space<vmem>>, vector<256x16xf32>
    %c0_1 = arith.constant 0 : index
    %c0_2 = arith.constant 0 : index
    %1 = vector.load %arg2[%c0_1, %c0_2] : memref<16x32xf32, #tpu.memory_space<vmem>>, vector<16x32xf32>
    %cst = arith.constant dense<0.000000e+00> : vector<256x32xf32>
    %2 = tpu.matmul %0, %1, %cst {dimension_numbers = #tpu.dot_dimension_numbers<[1], [0], [0], [1], [0, 0, 1, 1], [], []>} : vector<256x16xf32>, vector<16x32xf32>, vector<256x32xf32> -> vector<256x32xf32>
    %c0_3 = arith.constant 0 : index
    %c0_4 = arith.constant 0 : index
    %3 = vector.load %arg3[%c0_3, %c0_4] : memref<1x32xf32, #tpu.memory_space<vmem>>, vector<1x32xf32>
    %4 = vector.broadcast %3 : vector<1x32xf32> to vector<256x32xf32>
    %5 = arith.addf %2, %4 : vector<256x32xf32>
    %cst_5 = arith.constant 0.000000e+00 : f32
    %6 = vector.broadcast %cst_5 : f32 to vector<256x32xf32>
    %7 = arith.maximumf %5, %6 : vector<256x32xf32>
    %c0_6 = arith.constant 0 : index
    %c0_7 = arith.constant 0 : index
    %8 = vector.load %arg4[%c0_6, %c0_7] : memref<1x32xf32, #tpu.memory_space<vmem>>, vector<1x32xf32>
    %cst_8 = arith.constant dense<0.000000e+00> : vector<1x256xf32>
    %9 = tpu.matmul %8, %7, %cst_8 {dimension_numbers = #tpu.dot_dimension_numbers<[1], [1], [0], [0], [0, 0, 1, 0], [], []>} : vector<1x32xf32>, vector<256x32xf32>, vector<1x256xf32> -> vector<1x256xf32>
    %c0_9 = arith.constant 0 : index
    %c0_10 = arith.constant 0 : index
    %10 = vector.load %arg5[%c0_9, %c0_10] : memref<1x1xf32, #tpu.memory_space<vmem>>, vector<1x1xf32>
    %11 = vector.broadcast %10 : vector<1x1xf32> to vector<1x256xf32>
    %12 = arith.addf %9, %11 : vector<1x256xf32>
    %13 = vector.shape_cast %12 : vector<1x256xf32> to vector<1x1x256xf32>
    %c0_11 = arith.constant 0 : index
    %c0_12 = arith.constant 0 : index
    %c0_13 = arith.constant 0 : index
    %14 = vector.load %arg6[%c0_11, %c0_12, %c0_13] : memref<1x1x256xf32, #tpu.memory_space<vmem>>, vector<1x1x256xf32>
    tpu.vector_store %arg6[%c0_11, %c0_12, %c0_13], %13 {strides = array<i32>} : memref<1x1x256xf32, #tpu.memory_space<vmem>>, vector<1x1x256xf32>,
    return
  }
  func.func @transform_0(%arg0: i32) -> (i32, i32) {
    %c0_i32 = arith.constant 0 : i32
    %c0_i32_0 = arith.constant 0 : i32
    return %arg0, %c0_i32 : i32, i32
  }
  func.func @transform_1(%arg0: i32) -> (i32, i32) {
    %c0_i32 = arith.constant 0 : i32
    %c0_i32_0 = arith.constant 0 : i32
    %c0_i32_1 = arith.constant 0 : i32
    return %c0_i32, %c0_i32_0 : i32, i32
  }
  func.func @transform_2(%arg0: i32) -> (i32, i32) {
    %c0_i32 = arith.constant 0 : i32
    %c0_i32_0 = arith.constant 0 : i32
    %c0_i32_1 = arith.constant 0 : i32
    return %c0_i32, %c0_i32_0 : i32, i32
  }
  func.func @transform_3(%arg0: i32) -> (i32, i32) {
    %c0_i32 = arith.constant 0 : i32
    %c0_i32_0 = arith.constant 0 : i32
    %c0_i32_1 = arith.constant 0 : i32
    return %c0_i32, %c0_i32_0 : i32, i32
  }
  func.func @transform_4(%arg0: i32) -> (i32, i32) {
    %c0_i32 = arith.constant 0 : i32
    %c0_i32_0 = arith.constant 0 : i32
    %c0_i32_1 = arith.constant 0 : i32
    return %c0_i32, %c0_i32_0 : i32, i32
  }
  func.func @transform_5(%arg0: i32) -> (i32, i32, i32) {
    %c0_i32 = arith.constant 0 : i32
    %c0_i32_0 = arith.constant 0 : i32
    %c0_i32_1 = arith.constant 0 : i32
    return %arg0, %c0_i32, %c0_i32_0 : i32, i32, i32
  }
}

</mosaic_0001>

<llo_original>
// kernel: tpu_custom_call.1
$region0: #{tpu_custom_call.1}
  #allocation0 [shape = 'u32[]', space=smem, size = 0x4, offset = 0x4, fixed_abs, tag = 'smem constant byte address 0x4 - core index']
  #allocation1 [shape = 'u32[72,128]{1,0:T(1,128)}', space=vmem, size = 0x9000, scoped, tag = 'internal scratch']
  #allocation2 [shape = 'f32[1,1]{1,0:T(1,128)S(1)}', space=vmem, size = 0x200, scoped, tag = 'scoped memory for tpu_custom_call.1']
  %s0 = inlined_call_operand.vmem [shape: f32[256,16], index: 0, kind: input, shape index: {}]
  %s1 = inlined_call_operand.vmem [shape: f32[16,32], index: 1, kind: input, shape index: {}]
  %s2 = inlined_call_operand.vmem [shape: f32[1,32], index: 2, kind: input, shape index: {}]
  %s3 = inlined_call_operand.vmem [shape: f32[1,32], index: 3, kind: input, shape index: {}]
  %s4 = inlined_call_operand.<no memory space> [shape: f32[1,1], index: 4, kind: input, shape index: {}]
  %s5 = inlined_call_operand.hbm [shape: f32[1,1,256], index: 5, kind: output, shape index: {}]
  %s6 = sld [smem:[#allocation0]]
  $region30: #{tpu_custom_call.1} parent=0
    _
  %s8 = ssub.s32 1, %s6
  %s9 = scalar_select 0, %s8, %s6
  %v10 = vstv %s4
  %11 = vst [vmem:[#allocation2] sm:$0x1] %v10
  $region1: #{tpu_custom_call.1} parent=0
    #allocation3 [shape = 'u8[1024]{0}', space=vmem, size = 0x400, scoped, tag = 'output window, operand 0, single buffered']
    #allocation4 [shape = 's32[1]{0}', space=sflag, size = 0x4, scoped, tag = 'scoped memory for tpu_custom_call.1']
    %12 = vsyncpa [#allocation4], 0
    // Predicated region
    $region2: #{tpu_custom_call.1} parent=1 // pred_check
      _
    $region3: #{tpu_custom_call.1} parent=1 // pred_check_branch
      %14 = sbr.rel (0) target = $region5
    $region4: #{tpu_custom_call.1} parent=1 // pred_region
      _
    $region5: #{tpu_custom_call.1} parent=1 // pred_fallthru
      _
    // Predicated region
    $region6: #{tpu_custom_call.1} parent=1 // pred_check
      _
    $region7: #{tpu_custom_call.1} parent=1 // pred_check_branch
      %16 = sbr.rel (0) target = $region9
    $region8: #{tpu_custom_call.1} parent=1 // pred_region
      _
    $region9: #{tpu_custom_call.1} parent=1 // pred_fallthru
      _
    // Predicated region
    $region10: #{tpu_custom_call.1} parent=1 // pred_check
      _
    $region11: #{tpu_custom_call.1} parent=1 // pred_check_branch
      %18 = sbr.rel (0) target = $region13
    $region12: #{tpu_custom_call.1} parent=1 // pred_region
      _
    $region13: #{tpu_custom_call.1} parent=1 // pred_fallthru
      _
    // Predicated region
    $region14: #{tpu_custom_call.1} parent=1 // pred_check
      _
    $region15: #{tpu_custom_call.1} parent=1 // pred_check_branch
      %20 = sbr.rel (0) target = $region17
    $region16: #{tpu_custom_call.1} parent=1 // pred_region
      _
    $region17: #{tpu_custom_call.1} parent=1 // pred_fallthru
      _
    // Predicated region
    $region18: #{tpu_custom_call.1} parent=1 // pred_check
      _
    $region19: #{tpu_custom_call.1} parent=1 // pred_check_branch
      %22 = sbr.rel (0) target = $region21
    $region20: #{tpu_custom_call.1} parent=1 // pred_region
      _
    $region21: #{tpu_custom_call.1} parent=1 // pred_fallthru
      _
    %v23 = vld [vmem:[%s0] sm:$0xff]
    %v24 = vld [vmem:[%s0 + $0x8] sm:$0xff]
    %v25 = vld [vmem:[%s0 + $0x10] sm:$0xff]
    %v26 = vld [vmem:[%s0 + $0x18] sm:$0xff]
    %v27 = vld [vmem:[%s0 + $0x20] sm:$0xff]
    %v28 = vld [vmem:[%s0 + $0x28] sm:$0xff]
    %v29 = vld [vmem:[%s0 + $0x30] sm:$0xff]
    %v30 = vld [vmem:[%s0 + $0x38] sm:$0xff]
    %v31 = vld [vmem:[%s0 + $0x40] sm:$0xff]
    %v32 = vld [vmem:[%s0 + $0x48] sm:$0xff]
    %v33 = vld [vmem:[%s0 + $0x50] sm:$0xff]
    %v34 = vld [vmem:[%s0 + $0x58] sm:$0xff]
    %v35 = vld [vmem:[%s0 + $0x60] sm:$0xff]
    %v36 = vld [vmem:[%s0 + $0x68] sm:$0xff]
    %v37 = vld [vmem:[%s0 + $0x70] sm:$0xff]
    %v38 = vld [vmem:[%s0 + $0x78] sm:$0xff]
    %v39 = vld [vmem:[%s0 + $0x80] sm:$0xff]
    %v40 = vld [vmem:[%s0 + $0x88] sm:$0xff]
    %v41 = vld [vmem:[%s0 + $0x90] sm:$0xff]
    %v42 = vld [vmem:[%s0 + $0x98] sm:$0xff]
    %v43 = vld [vmem:[%s0 + $0xa0] sm:$0xff]
    %v44 = vld [vmem:[%s0 + $0xa8] sm:$0xff]
    %v45 = vld [vmem:[%s0 + $0xb0] sm:$0xff]
    %v46 = vld [vmem:[%s0 + $0xb8] sm:$0xff]
    %v47 = vld [vmem:[%s0 + $0xc0] sm:$0xff]
    %v48 = vld [vmem:[%s0 + $0xc8] sm:$0xff]
    %v49 = vld [vmem:[%s0 + $0xd0] sm:$0xff]
    %v50 = vld [vmem:[%s0 + $0xd8] sm:$0xff]
    %v51 = vld [vmem:[%s0 + $0xe0] sm:$0xff]
    %v52 = vld [vmem:[%s0 + $0xe8] sm:$0xff]
    %v53 = vld [vmem:[%s0 + $0xf0] sm:$0xff]
    %v54 = vld [vmem:[%s0 + $0xf8] sm:$0xff]
    %v55 = vld [vmem:[%s1] sm:$0xff]
    %v56 = vld [vmem:[%s1 + $0x8] sm:$0xff]
    %v57 = vld [vmem:[%s2] sm:$0x1]
    %v59 = vperm.slane %v57, 0
    %vm61 = vcmask 130048
    %v63 = vsel %vm61, %v23, 0
    %v66 = vsel %vm61, %v24, 0
    %v69 = vsel %vm61, %v25, 0
    %v72 = vsel %vm61, %v26, 0
    %v75 = vsel %vm61, %v27, 0
    %v78 = vsel %vm61, %v28, 0
    %v81 = vsel %vm61, %v29, 0
    %v84 = vsel %vm61, %v30, 0
    %v87 = vsel %vm61, %v31, 0
    %v90 = vsel %vm61, %v32, 0
    %v93 = vsel %vm61, %v33, 0
    %v96 = vsel %vm61, %v34, 0
    %v99 = vsel %vm61, %v35, 0
    %v102 = vsel %vm61, %v36, 0
    %v105 = vsel %vm61, %v37, 0
    %v108 = vsel %vm61, %v38, 0
    %v111 = vsel %vm61, %v39, 0
    %v114 = vsel %vm61, %v40, 0
    %v117 = vsel %vm61, %v41, 0
    %v120 = vsel %vm61, %v42, 0
    %v123 = vsel %vm61, %v43, 0
    %v126 = vsel %vm61, %v44, 0
    %v129 = vsel %vm61, %v45, 0
    %v132 = vsel %vm61, %v46, 0
    %v135 = vsel %vm61, %v47, 0
    %v138 = vsel %vm61, %v48, 0
    %v141 = vsel %vm61, %v49, 0
    %v144 = vsel %vm61, %v50, 0
    %v147 = vsel %vm61, %v51, 0
    %v150 = vsel %vm61, %v52, 0
    %v153 = vsel %vm61, %v53, 0
    %v156 = vsel %vm61, %v54, 0
    %158 = vmatpush.msra.mxu0 0.0
    %159 = vmatpush.msra.mxu0 0.0
    %160 = vmatpush.msra.mxu0 0.0
    %161 = vmatpush.msra.mxu0 0.0
    %162 = vmatpush.msra.mxu0 0.0
    %163 = vmatpush.msra.mxu0 0.0
    %164 = vmatpush.msra.mxu0 0.0
    %165 = vmatpush.msra.mxu0 0.0
    %166 = vmatpush.msra.mxu0 0.0
    %167 = vmatpush.msra.mxu0 0.0
    %168 = vmatpush.msra.mxu0 0.0
    %169 = vmatpush.msra.mxu0 0.0
    %170 = vmatpush.msra.mxu0 0.0
    %171 = vmatpush.msra.mxu0 0.0
    %172 = vmatpush.msra.mxu0 %v56
    %173 = vmatpush.msra.mxu0 %v55
    %174 = vmatmul.f32.gmra.mxu0 %v63
    %v175 = vpop.f32.mrf.mxu0
    %v176 = vadd.f32 %v59, %v175
    %177 = vmatmul.f32.gmra.mxu0 %v66
    %v178 = vpop.f32.mrf.mxu0
    %v179 = vadd.f32 %v59, %v178
    %180 = vmatmul.f32.gmra.mxu0 %v69
    %v181 = vpop.f32.mrf.mxu0
    %v182 = vadd.f32 %v59, %v181
    %183 = vmatmul.f32.gmra.mxu0 %v72
    %v184 = vpop.f32.mrf.mxu0
    %v185 = vadd.f32 %v59, %v184
    %186 = vmatmul.f32.gmra.mxu0 %v75
    %v187 = vpop.f32.mrf.mxu0
    %v188 = vadd.f32 %v59, %v187
    %189 = vmatmul.f32.gmra.mxu0 %v78
    %v190 = vpop.f32.mrf.mxu0
    %v191 = vadd.f32 %v59, %v190
    %192 = vmatmul.f32.gmra.mxu0 %v81
    %v193 = vpop.f32.mrf.mxu0
    %v194 = vadd.f32 %v59, %v193
    %195 = vmatmul.f32.gmra.mxu0 %v84
    %v196 = vpop.f32.mrf.mxu0
    %v197 = vadd.f32 %v59, %v196
    %198 = vmatmul.f32.gmra.mxu0 %v87
    %v199 = vpop.f32.mrf.mxu0
    %v200 = vadd.f32 %v59, %v199
    %201 = vmatmul.f32.gmra.mxu0 %v90
    %v202 = vpop.f32.mrf.mxu0
    %v203 = vadd.f32 %v59, %v202
    %204 = vmatmul.f32.gmra.mxu0 %v93
    %v205 = vpop.f32.mrf.mxu0
    %v206 = vadd.f32 %v59, %v205
    %207 = vmatmul.f32.gmra.mxu0 %v96
    %v208 = vpop.f32.mrf.mxu0
    %v209 = vadd.f32 %v59, %v208
    %210 = vmatmul.f32.gmra.mxu0 %v99
    %v211 = vpop.f32.mrf.mxu0
    %v212 = vadd.f32 %v59, %v211
    %213 = vmatmul.f32.gmra.mxu0 %v102
    %v214 = vpop.f32.mrf.mxu0
    %v215 = vadd.f32 %v59, %v214
    %216 = vmatmul.f32.gmra.mxu0 %v105
    %v217 = vpop.f32.mrf.mxu0
    %v218 = vadd.f32 %v59, %v217
    %219 = vmatmul.f32.gmra.mxu0 %v108
    %v220 = vpop.f32.mrf.mxu0
    %v221 = vadd.f32 %v59, %v220
    %222 = vmatmul.f32.gmra.mxu0 %v111
    %v223 = vpop.f32.mrf.mxu0
    %v224 = vadd.f32 %v59, %v223
    %225 = vmatmul.f32.gmra.mxu0 %v114
    %v226 = vpop.f32.mrf.mxu0
    %v227 = vadd.f32 %v59, %v226
    %228 = vmatmul.f32.gmra.mxu0 %v117
    %v229 = vpop.f32.mrf.mxu0
    %v230 = vadd.f32 %v59, %v229
    %231 = vmatmul.f32.gmra.mxu0 %v120
    %v232 = vpop.f32.mrf.mxu0
    %v233 = vadd.f32 %v59, %v232
    %234 = vmatmul.f32.gmra.mxu0 %v123
    %v235 = vpop.f32.mrf.mxu0
    %v236 = vadd.f32 %v59, %v235
    %237 = vmatmul.f32.gmra.mxu0 %v126
    %v238 = vpop.f32.mrf.mxu0
    %v239 = vadd.f32 %v59, %v238
    %240 = vmatmul.f32.gmra.mxu0 %v129
    %v241 = vpop.f32.mrf.mxu0
    %v242 = vadd.f32 %v59, %v241
    %243 = vmatmul.f32.gmra.mxu0 %v132
    %v244 = vpop.f32.mrf.mxu0
    %v245 = vadd.f32 %v59, %v244
    %246 = vmatmul.f32.gmra.mxu0 %v135
    %v247 = vpop.f32.mrf.mxu0
    %v248 = vadd.f32 %v59, %v247
    %249 = vmatmul.f32.gmra.mxu0 %v138
    %v250 = vpop.f32.mrf.mxu0
    %v251 = vadd.f32 %v59, %v250
    %252 = vmatmul.f32.gmra.mxu0 %v141
    %v253 = vpop.f32.mrf.mxu0
    %v254 = vadd.f32 %v59, %v253
    %255 = vmatmul.f32.gmra.mxu0 %v144
    %v256 = vpop.f32.mrf.mxu0
    %v257 = vadd.f32 %v59, %v256
    %258 = vmatmul.f32.gmra.mxu0 %v147
    %v259 = vpop.f32.mrf.mxu0
    %v260 = vadd.f32 %v59, %v259
    %261 = vmatmul.f32.gmra.mxu0 %v150
    %v262 = vpop.f32.mrf.mxu0
    %v263 = vadd.f32 %v59, %v262
    %264 = vmatmul.f32.gmra.mxu0 %v153
    %v265 = vpop.f32.mrf.mxu0
    %v266 = vadd.f32 %v59, %v265
    %267 = vmatmul.f32.gmra.mxu0 %v156
    %v268 = vpop.f32.mrf.mxu0
    %v269 = vadd.f32 %v59, %v268
    %270 = vdwg.mxu0
    %v271 = vmax.f32 %v176, 0.0
    %v272 = vmax.f32 %v179, 0.0
    %v273 = vmax.f32 %v182, 0.0
    %v274 = vmax.f32 %v185, 0.0
    %v275 = vmax.f32 %v188, 0.0
    %v276 = vmax.f32 %v191, 0.0
    %v277 = vmax.f32 %v194, 0.0
    %v278 = vmax.f32 %v197, 0.0
    %v279 = vmax.f32 %v200, 0.0
    %v280 = vmax.f32 %v203, 0.0
    %v281 = vmax.f32 %v206, 0.0
    %v282 = vmax.f32 %v209, 0.0
    %v283 = vmax.f32 %v212, 0.0
    %v284 = vmax.f32 %v215, 0.0
    %v285 = vmax.f32 %v218, 0.0
    %v286 = vmax.f32 %v221, 0.0
    %v287 = vmax.f32 %v224, 0.0
    %v288 = vmax.f32 %v227, 0.0
    %v289 = vmax.f32 %v230, 0.0
    %v290 = vmax.f32 %v233, 0.0
    %v291 = vmax.f32 %v236, 0.0
    %v292 = vmax.f32 %v239, 0.0
    %v293 = vmax.f32 %v242, 0.0
    %v294 = vmax.f32 %v245, 0.0
    %v295 = vmax.f32 %v248, 0.0
    %v296 = vmax.f32 %v251, 0.0
    %v297 = vmax.f32 %v254, 0.0
    %v298 = vmax.f32 %v257, 0.0
    %v299 = vmax.f32 %v260, 0.0
    %v300 = vmax.f32 %v263, 0.0
    %v301 = vmax.f32 %v266, 0.0
    %v302 = vmax.f32 %v269, 0.0
    %v303 = vld [vmem:[%s3] sm:$0x1]
    %v304 = vld [vmem:[#allocation2] sm:$0x1]
    %306 = vset.pattern.permute.xlu0 0
    %307 = vperm.xlu0 %306, %v304
    %v308 = vpop.permute.xlu0 %307
    %v310 = vperm.slane %v308, 0
    %vm311 = vcmask 261120
    %v313 = vsel %vm311, %v303, 0
    %v316 = vsel %vm311, %v271, 0
    %v319 = vsel %vm311, %v272, 0
    %v322 = vsel %vm311, %v273, 0
    %v325 = vsel %vm311, %v274, 0
    %v328 = vsel %vm311, %v275, 0
    %v331 = vsel %vm311, %v276, 0
    %v334 = vsel %vm311, %v277, 0
    %v337 = vsel %vm311, %v278, 0
    %v340 = vsel %vm311, %v279, 0
    %v343 = vsel %vm311, %v280, 0
    %v346 = vsel %vm311, %v281, 0
    %v349 = vsel %vm311, %v282, 0
    %v352 = vsel %vm311, %v283, 0
    %v355 = vsel %vm311, %v284, 0
    %v358 = vsel %vm311, %v285, 0
    %v361 = vsel %vm311, %v286, 0
    %v364 = vsel %vm311, %v287, 0
    %v367 = vsel %vm311, %v288, 0
    %v370 = vsel %vm311, %v289, 0
    %v373 = vsel %vm311, %v290, 0
    %v376 = vsel %vm311, %v291, 0
    %v379 = vsel %vm311, %v292, 0
    %v382 = vsel %vm311, %v293, 0
    %v385 = vsel %vm311, %v294, 0
    %v388 = vsel %vm311, %v295, 0
    %v391 = vsel %vm311, %v296, 0
    %v394 = vsel %vm311, %v297, 0
    %v397 = vsel %vm311, %v298, 0
    %v400 = vsel %vm311, %v299, 0
    %v403 = vsel %vm311, %v300, 0
    %v406 = vsel %vm311, %v301, 0
    %v409 = vsel %vm311, %v302, 0
    %411 = vmatpush.xpose.msra.mxu0 %v361
    %412 = vmatpush.xpose.msra.mxu0 %v358
    %413 = vmatpush.xpose.msra.mxu0 %v355
    %414 = vmatpush.xpose.msra.mxu0 %v352
    %415 = vmatpush.xpose.msra.mxu0 %v349
    %416 = vmatpush.xpose.msra.mxu0 %v346
    %417 = vmatpush.xpose.msra.mxu0 %v343
    %418 = vmatpush.xpose.msra.mxu0 %v340
    %419 = vmatpush.xpose.msra.mxu0 %v337
    %420 = vmatpush.xpose.msra.mxu0 %v334
    %421 = vmatpush.xpose.msra.mxu0 %v331
    %422 = vmatpush.xpose.msra.mxu0 %v328
    %423 = vmatpush.xpose.msra.mxu0 %v325
    %424 = vmatpush.xpose.msra.mxu0 %v322
    %425 = vmatpush.xpose.msra.mxu0 %v319
    %426 = vmatpush.xpose.msra.mxu0 %v316
    %427 = vmatmul.f32.gmra.mxu0 %v313
    %v428 = vpop.f32.mrf.mxu0
    %v429 = vadd.f32 %v310, %v428
    %430 = vdwg.mxu0
    %431 = vmatpush.xpose.msra.mxu0 %v409
    %432 = vmatpush.xpose.msra.mxu0 %v406
    %433 = vmatpush.xpose.msra.mxu0 %v403
    %434 = vmatpush.xpose.msra.mxu0 %v400
    %435 = vmatpush.xpose.msra.mxu0 %v397
    %436 = vmatpush.xpose.msra.mxu0 %v394
    %437 = vmatpush.xpose.msra.mxu0 %v391
    %438 = vmatpush.xpose.msra.mxu0 %v388
    %439 = vmatpush.xpose.msra.mxu0 %v385
    %440 = vmatpush.xpose.msra.mxu0 %v382
    %441 = vmatpush.xpose.msra.mxu0 %v379
    %442 = vmatpush.xpose.msra.mxu0 %v376
    %443 = vmatpush.xpose.msra.mxu0 %v373
    %444 = vmatpush.xpose.msra.mxu0 %v370
    %445 = vmatpush.xpose.msra.mxu0 %v367
    %446 = vmatpush.xpose.msra.mxu0 %v364
    %447 = vmatmul.f32.gmra.mxu0 %v313
    %v448 = vpop.f32.mrf.mxu0
    %v449 = vadd.f32 %v310, %v448
    %450 = vdwg.mxu0
    %v453 = vrot.slane %v449, 7
    %vm454 = vcmask 1040384
    %v455 = vsel %vm454, %v429, %v453
    %v457 = vlaneseq
    %vm458 = vcmp.ge.s32.totalorder %v457, 0
    %vm459 = vcmp.lt.s32.totalorder %v457, 256
    %vm460 = vmand %vm458, %vm459
    %461 = vst.msk [vmem:[#allocation3] sm:$0x3] %vm460, %v455
    // Predicated region
    $region22: #{tpu_custom_call.1} parent=1 // pred_check
      _
    $region23: #{tpu_custom_call.1} parent=1 // pred_check_branch
      %463 = sbr.rel (0) target = $region25
    $region24: #{tpu_custom_call.1} parent=1 // pred_region
      %465 = vsyncadd [#allocation4], 0
      %s467 = sshll.u32 [#allocation3], 4
      %s468 = int_to_ptr.vmem [resolvable:$true] %s467
      %s469 = sshll.u32 %s5, 4
      %s470 = int_to_ptr.hbm [resolvable:$true] %s469
      %472 = dma.vmem_to_hbm [thread:$0]  %s468, 32, %s470, [#allocation4]
    $region25: #{tpu_custom_call.1} parent=1 // pred_fallthru
      _
    // Predicated region
    $region26: #{tpu_custom_call.1} parent=1 // pred_check
      _
    $region27: #{tpu_custom_call.1} parent=1 // pred_check_branch
      %474 = sbr.rel (0) target = $region29
    $region28: #{tpu_custom_call.1} parent=1 // pred_region
      %476 = dma.done [#allocation4], 32
    $region29: #{tpu_custom_call.1} parent=1 // pred_fallthru
      _
    %477 = vsyncpa [#allocation4], 1

</llo_original>
